<compile_context>
chip_gen: v7x
topology: tpu7x:2x2x1
jax: 0.10.0
libtpu: 0.0.40
codegen_flags: <defaults>
</compile_context>

<pallas_src>
import functools

import jax
import jax.numpy as jnp
from jax.experimental import pallas as pl
from jax.experimental.pallas import tpu as pltpu

LEAKY_SLOPE = 0.01   # nn.LeakyReLU() default negative_slope
BN_EPS = 1e-5        # nn.BatchNorm1d default eps


def _round_up(n, m):
    return ((n + m - 1) // m) * m


def fused_mlp_kernel(x_ref, w1_ref, g1_ref, b1_ref, w2_ref, g2_ref, b2_ref, o_ref, *, n_rows):
    """Whole 2-layer MLP fused in VMEM: LeakyReLU(BN(x@W1)) -> LeakyReLU(BN(h@W2))."""
    inv_n = 1.0 / float(n_rows)

    def bn_act(y, gamma, beta):
        # Training-mode BatchNorm1d folded into one scale/shift, stats from a single sweep.
        s = jnp.sum(y, axis=0, keepdims=True)
        sq = jnp.sum(y * y, axis=0, keepdims=True)
        mean = s * inv_n
        var = sq * inv_n - mean * mean                      # biased variance (f32 stats)
        scale = gamma * jax.lax.rsqrt(var + BN_EPS)         # padded cols: gamma=0 -> scale=0
        shift = beta - mean * scale                         # padded cols stay exactly 0
        y = y * scale + shift
        # LeakyReLU(negative_slope=0.01)
        return jnp.where(y > 0, y, LEAKY_SLOPE * y)

    xb = x_ref[...].astype(jnp.bfloat16)                    # native MXU bf16 path
    y1 = jnp.dot(xb, w1_ref[...], preferred_element_type=jnp.float32)      # (B, Hp) f32
    h = bn_act(y1, g1_ref[...], b1_ref[...])                               # stays in VMEM
    y2 = jnp.dot(h.astype(jnp.bfloat16), w2_ref[...],
                 preferred_element_type=jnp.float32)                       # (B, Op) f32
    o_ref[...] = bn_act(y2, g2_ref[...], b2_ref[...])


def _vmem_limit_bytes(B, Kp, Hp, Op):
    """Actual footprint (bf16 weights, f32 activations) with double-buffer + compute headroom."""
    x_b = B * Kp * 4
    w_b = Kp * Hp * 2 + Hp * Op * 2
    vec_b = 2 * 8 * Hp * 4 + 2 * 8 * Op * 4                 # gamma/beta, sublane-padded
    o_b = B * Op * 4
    act_b = B * Hp * 4 + B * Op * 4                          # in-kernel f32 intermediates
    total = 2 * (x_b + w_b + vec_b + o_b) + 2 * act_b
    return int(min(max(2 * total, 8 << 20), 64 << 20))       # >=8 MiB, <= v7x physical VMEM


def fused_mlp(x, w1, g1, b1, w2, g2, b2):
    """Single pallas_call; every operand lives in one full-array VMEM block (grid of 1)."""
    B, Kp = x.shape
    Hp = w1.shape[1]
    Op = w2.shape[1]
    full = lambda shape: pl.BlockSpec(shape, lambda i: tuple(0 for _ in shape))
    kernel = functools.partial(fused_mlp_kernel, n_rows=B)
    return pl.pallas_call(
        kernel,
        grid=(1,),
        out_shape=jax.ShapeDtypeStruct((B, Op), jnp.float32),
        in_specs=[
            full((B, Kp)),     # x (K-padded)
            full((Kp, Hp)),    # W1 (pre-transposed, padded, bf16)
            full((1, Hp)),     # gamma1
            full((1, Hp)),     # beta1
            full((Hp, Op)),    # W2 (pre-transposed, padded, bf16)
            full((1, Op)),     # gamma2
            full((1, Op)),     # beta2
        ],
        out_specs=full((B, Op)),
        compiler_params=pltpu.CompilerParams(
            dimension_semantics=("arbitrary",),
            vmem_limit_bytes=_vmem_limit_bytes(B, Kp, Hp, Op),
        ),
    )(x, w1, g1, b1, w2, g2, b2)


def init_params(key, layer_sizes=(300, 150, 50)):
    """PyTorch-style init: Linear W,b ~ U(-1/sqrt(fin), 1/sqrt(fin)); BN gamma=1, beta=0."""
    raw = []
    for i, (fin, fout) in enumerate(zip(layer_sizes[:-1], layer_sizes[1:])):
        k_w, k_b = jax.random.split(jax.random.fold_in(key, i))
        bound = 1.0 / (fin ** 0.5)
        w = jax.random.uniform(k_w, (fout, fin), jnp.float32, -bound, bound)  # torch (out, in)
        b = jax.random.uniform(k_b, (fout,), jnp.float32, -bound, bound)
        gamma = jnp.ones((fout,), jnp.float32)
        beta = jnp.zeros((fout,), jnp.float32)
        raw.append((w, b, gamma, beta))
    return raw


def pack_kernel_params(raw, layer_sizes=(300, 150, 50)):
    """One-time packing (hoisted out of the per-forward path):
       - transpose Linear weights to (in, out), pad K and output dims to multiples of 128,
       - cast weights to bfloat16 (f32 accumulation stays in the kernel),
       - drop the Linear bias (cancelled exactly by training-mode BN mean subtraction),
       - zero-fill all padding so padded rows/columns contribute exactly 0.
    """
    In, H, Out = layer_sizes
    Kp, Hp, Op = _round_up(In, 128), _round_up(H, 128), _round_up(Out, 128)
    (w1, _b1, g1, be1), (w2, _b2, g2, be2) = raw

    w1p = jnp.zeros((Kp, Hp), jnp.float32).at[:In, :H].set(w1.T).astype(jnp.bfloat16)
    g1p = jnp.zeros((1, Hp), jnp.float32).at[:, :H].set(g1)
    be1p = jnp.zeros((1, Hp), jnp.float32).at[:, :H].set(be1)

    w2p = jnp.zeros((Hp, Op), jnp.float32).at[:H, :Out].set(w2.T).astype(jnp.bfloat16)
    g2p = jnp.zeros((1, Op), jnp.float32).at[:, :Out].set(g2)
    be2p = jnp.zeros((1, Op), jnp.float32).at[:, :Out].set(be2)

    return (w1p, g1p, be1p, w2p, g2p, be2p)


@functools.partial(jax.jit, static_argnames=("out_features",))
def neural_net_forward(x, packed, out_features):
    w1, g1, be1, w2, g2, be2 = packed
    Kp = w1.shape[0]
    pad = Kp - x.shape[1]
    if pad:
        x = jnp.pad(x, ((0, 0), (0, pad)))        # zero-pad K so the first matmul is aligned
    y = fused_mlp(x, w1, g1, be1, w2, g2, be2)    # (B, Op) lane-dense, padded cols exactly 0
    return y[:, :out_features]                    # strip feature padding


def ref_forward(x, raw):
    """Pure-JAX f32 reference of the PyTorch forward (Linear+bias -> training-mode BN -> LeakyReLU)."""
    for (w, b, gamma, beta) in raw:
        y = x @ w.T + b
        mean = jnp.mean(y, axis=0, keepdims=True)
        var = jnp.mean((y - mean) ** 2, axis=0, keepdims=True)
        y = (y - mean) * jax.lax.rsqrt(var + BN_EPS) * gamma + beta
        x = jnp.where(y > 0, y, LEAKY_SLOPE * y)
    return x


if __name__ == "__main__":
    layer_sizes = (300, 150, 50)   # NeuralNet default
    batch = 8

    key = jax.random.PRNGKey(0)
    k_x, k_p = jax.random.split(key)
    x = jax.random.normal(k_x, (batch, layer_sizes[0]), jnp.float32)

    raw_params = init_params(k_p, layer_sizes)
    packed = pack_kernel_params(raw_params, layer_sizes)

    out = neural_net_forward(x, packed, out_features=layer_sizes[-1])
    out = jax.block_until_ready(out)

    ref = ref_forward(x, raw_params)

    assert out.shape == (batch, layer_sizes[-1]), out.shape
    assert bool(jnp.all(jnp.isfinite(out)))
    # bf16 weights/activations in the matmuls -> loosened tolerance vs. the f32 reference.
    max_err = float(jnp.max(jnp.abs(out - ref)))
    assert jnp.allclose(out, ref, rtol=2e-2, atol=1e-1), max_err
    print("KERNEL_OK")
</pallas_src>

<mosaic_0001>
module attributes {stable_mosaic.version = 11 : i64} {
  func.func @fused_mlp_kernel(%arg0: i32, %arg1: memref<8x384xf32, #tpu.memory_space<vmem>>, %arg2: memref<384x256xbf16, #tpu.memory_space<vmem>>, %arg3: memref<1x256xf32, #tpu.memory_space<vmem>>, %arg4: memref<1x256xf32, #tpu.memory_space<vmem>>, %arg5: memref<256x128xbf16, #tpu.memory_space<vmem>>, %arg6: memref<1x128xf32, #tpu.memory_space<vmem>>, %arg7: memref<1x128xf32, #tpu.memory_space<vmem>>, %arg8: memref<8x128xf32, #tpu.memory_space<vmem>>) attributes {dimension_semantics = [#tpu.dimension_semantics<arbitrary>], iteration_bounds = array<i64: 1>, scalar_prefetch = 0 : i64, scratch_operands = 0 : i64, tpu.core_type = #tpu.core_type<tc>, window_params = [{pipeline_mode = #tpu.pipeline_mode<synchronous>, transform_indices = @transform_0, window_bounds = array<i64: 8, 384>}, {pipeline_mode = #tpu.pipeline_mode<synchronous>, transform_indices = @transform_1, window_bounds = array<i64: 384, 256>}, {pipeline_mode = #tpu.pipeline_mode<synchronous>, transform_indices = @transform_2, window_bounds = array<i64: 1, 256>}, {pipeline_mode = #tpu.pipeline_mode<synchronous>, transform_indices = @transform_3, window_bounds = array<i64: 1, 256>}, {pipeline_mode = #tpu.pipeline_mode<synchronous>, transform_indices = @transform_4, window_bounds = array<i64: 256, 128>}, {pipeline_mode = #tpu.pipeline_mode<synchronous>, transform_indices = @transform_5, window_bounds = array<i64: 1, 128>}, {pipeline_mode = #tpu.pipeline_mode<synchronous>, transform_indices = @transform_6, window_bounds = array<i64: 1, 128>}, {pipeline_mode = #tpu.pipeline_mode<synchronous>, transform_indices = @transform_7, window_bounds = array<i64: 8, 128>}]} {
    %c0 = arith.constant 0 : index
    %c0_0 = arith.constant 0 : index
    %0 = vector.load %arg1[%c0, %c0_0] : memref<8x384xf32, #tpu.memory_space<vmem>>, vector<8x384xf32>
    %1 = arith.truncf %0 : vector<8x384xf32> to vector<8x384xbf16>
    %c0_1 = arith.constant 0 : index
    %c0_2 = arith.constant 0 : index
    %2 = vector.load %arg2[%c0_1, %c0_2] : memref<384x256xbf16, #tpu.memory_space<vmem>>, vector<384x256xbf16>
    %cst = arith.constant dense<0.000000e+00> : vector<8x256xf32>
    %3 = tpu.matmul %1, %2, %cst {dimension_numbers = #tpu.dot_dimension_numbers<[1], [0], [0], [1], [0, 0, 1, 1], [], []>} : vector<8x384xbf16>, vector<384x256xbf16>, vector<8x256xf32> -> vector<8x256xf32>
    %c0_3 = arith.constant 0 : index
    %c0_4 = arith.constant 0 : index
    %4 = vector.load %arg3[%c0_3, %c0_4] : memref<1x256xf32, #tpu.memory_space<vmem>>, vector<1x256xf32>
    %c0_5 = arith.constant 0 : index
    %c0_6 = arith.constant 0 : index
    %5 = vector.load %arg4[%c0_5, %c0_6] : memref<1x256xf32, #tpu.memory_space<vmem>>, vector<1x256xf32>
    %cst_7 = arith.constant dense<0.000000e+00> : vector<256xf32>
    %6 = vector.multi_reduction <add>, %3, %cst_7 [0] : vector<8x256xf32> to vector<256xf32>
    %7 = vector.shape_cast %6 : vector<256xf32> to vector<1x256xf32>
    %8 = arith.mulf %3, %3 : vector<8x256xf32>
    %cst_8 = arith.constant dense<0.000000e+00> : vector<256xf32>
    %9 = vector.multi_reduction <add>, %8, %cst_8 [0] : vector<8x256xf32> to vector<256xf32>
    %10 = vector.shape_cast %9 : vector<256xf32> to vector<1x256xf32>
    %cst_9 = arith.constant 1.250000e-01 : f32
    %11 = vector.broadcast %cst_9 : f32 to vector<1x256xf32>
    %12 = arith.mulf %7, %11 : vector<1x256xf32>
    %cst_10 = arith.constant 1.250000e-01 : f32
    %13 = vector.broadcast %cst_10 : f32 to vector<1x256xf32>
    %14 = arith.mulf %10, %13 : vector<1x256xf32>
    %15 = arith.mulf %12, %12 : vector<1x256xf32>
    %16 = arith.subf %14, %15 : vector<1x256xf32>
    %cst_11 = arith.constant 9.99999974E-6 : f32
    %17 = vector.broadcast %cst_11 : f32 to vector<1x256xf32>
    %18 = arith.addf %16, %17 : vector<1x256xf32>
    %19 = math.rsqrt %18 : vector<1x256xf32>
    %20 = arith.mulf %4, %19 : vector<1x256xf32>
    %21 = arith.mulf %12, %20 : vector<1x256xf32>
    %22 = arith.subf %5, %21 : vector<1x256xf32>
    %23 = vector.broadcast %20 : vector<1x256xf32> to vector<8x256xf32>
    %24 = arith.mulf %3, %23 : vector<8x256xf32>
    %25 = vector.broadcast %22 : vector<1x256xf32> to vector<8x256xf32>
    %26 = arith.addf %24, %25 : vector<8x256xf32>
    %cst_12 = arith.constant 0.000000e+00 : f32
    %27 = vector.broadcast %cst_12 : f32 to vector<8x256xf32>
    %28 = arith.cmpf ogt, %26, %27 : vector<8x256xf32>
    %cst_13 = arith.constant 0.00999999977 : f32
    %29 = vector.broadcast %cst_13 : f32 to vector<8x256xf32>
    %30 = arith.mulf %29, %26 : vector<8x256xf32>
    %31 = arith.select %28, %26, %30 : vector<8x256xi1>, vector<8x256xf32>
    %32 = arith.truncf %31 : vector<8x256xf32> to vector<8x256xbf16>
    %c0_14 = arith.constant 0 : index
    %c0_15 = arith.constant 0 : index
    %33 = vector.load %arg5[%c0_14, %c0_15] : memref<256x128xbf16, #tpu.memory_space<vmem>>, vector<256x128xbf16>
    %cst_16 = arith.constant dense<0.000000e+00> : vector<8x128xf32>
    %34 = tpu.matmul %32, %33, %cst_16 {dimension_numbers = #tpu.dot_dimension_numbers<[1], [0], [0], [1], [0, 0, 1, 1], [], []>} : vector<8x256xbf16>, vector<256x128xbf16>, vector<8x128xf32> -> vector<8x128xf32>
    %c0_17 = arith.constant 0 : index
    %c0_18 = arith.constant 0 : index
    %35 = vector.load %arg6[%c0_17, %c0_18] : memref<1x128xf32, #tpu.memory_space<vmem>>, vector<1x128xf32>
    %c0_19 = arith.constant 0 : index
    %c0_20 = arith.constant 0 : index
    %36 = vector.load %arg7[%c0_19, %c0_20] : memref<1x128xf32, #tpu.memory_space<vmem>>, vector<1x128xf32>
    %cst_21 = arith.constant dense<0.000000e+00> : vector<128xf32>
    %37 = vector.multi_reduction <add>, %34, %cst_21 [0] : vector<8x128xf32> to vector<128xf32>
    %38 = vector.shape_cast %37 : vector<128xf32> to vector<1x128xf32>
    %39 = arith.mulf %34, %34 : vector<8x128xf32>
    %cst_22 = arith.constant dense<0.000000e+00> : vector<128xf32>
    %40 = vector.multi_reduction <add>, %39, %cst_22 [0] : vector<8x128xf32> to vector<128xf32>
    %41 = vector.shape_cast %40 : vector<128xf32> to vector<1x128xf32>
    %cst_23 = arith.constant 1.250000e-01 : f32
    %42 = vector.broadcast %cst_23 : f32 to vector<1x128xf32>
    %43 = arith.mulf %38, %42 : vector<1x128xf32>
    %cst_24 = arith.constant 1.250000e-01 : f32
    %44 = vector.broadcast %cst_24 : f32 to vector<1x128xf32>
    %45 = arith.mulf %41, %44 : vector<1x128xf32>
    %46 = arith.mulf %43, %43 : vector<1x128xf32>
    %47 = arith.subf %45, %46 : vector<1x128xf32>
    %cst_25 = arith.constant 9.99999974E-6 : f32
    %48 = vector.broadcast %cst_25 : f32 to vector<1x128xf32>
    %49 = arith.addf %47, %48 : vector<1x128xf32>
    %50 = math.rsqrt %49 : vector<1x128xf32>
    %51 = arith.mulf %35, %50 : vector<1x128xf32>
    %52 = arith.mulf %43, %51 : vector<1x128xf32>
    %53 = arith.subf %36, %52 : vector<1x128xf32>
    %54 = vector.broadcast %51 : vector<1x128xf32> to vector<8x128xf32>
    %55 = arith.mulf %34, %54 : vector<8x128xf32>
    %56 = vector.broadcast %53 : vector<1x128xf32> to vector<8x128xf32>
    %57 = arith.addf %55, %56 : vector<8x128xf32>
    %cst_26 = arith.constant 0.000000e+00 : f32
    %58 = vector.broadcast %cst_26 : f32 to vector<8x128xf32>
    %59 = arith.cmpf ogt, %57, %58 : vector<8x128xf32>
    %cst_27 = arith.constant 0.00999999977 : f32
    %60 = vector.broadcast %cst_27 : f32 to vector<8x128xf32>
    %61 = arith.mulf %60, %57 : vector<8x128xf32>
    %62 = arith.select %59, %57, %61 : vector<8x128xi1>, vector<8x128xf32>
    %c0_28 = arith.constant 0 : index
    %c0_29 = arith.constant 0 : index
    %63 = vector.load %arg8[%c0_28, %c0_29] : memref<8x128xf32, #tpu.memory_space<vmem>>, vector<8x128xf32>
    tpu.vector_store %arg8[%c0_28, %c0_29], %62 {strides = array<i32>} : memref<8x128xf32, #tpu.memory_space<vmem>>, vector<8x128xf32>,
    return
  }
  func.func @transform_0(%arg0: i32) -> (i32, i32) {
    %c0_i32 = arith.constant 0 : i32
    %c0_i32_0 = arith.constant 0 : i32
    %c0_i32_1 = arith.constant 0 : i32
    return %c0_i32, %c0_i32_0 : i32, i32
  }
  func.func @transform_1(%arg0: i32) -> (i32, i32) {
    %c0_i32 = arith.constant 0 : i32
    %c0_i32_0 = arith.constant 0 : i32
    %c0_i32_1 = arith.constant 0 : i32
    return %c0_i32, %c0_i32_0 : i32, i32
  }
  func.func @transform_2(%arg0: i32) -> (i32, i32) {
    %c0_i32 = arith.constant 0 : i32
    %c0_i32_0 = arith.constant 0 : i32
    %c0_i32_1 = arith.constant 0 : i32
    return %c0_i32, %c0_i32_0 : i32, i32
  }
  func.func @transform_3(%arg0: i32) -> (i32, i32) {
    %c0_i32 = arith.constant 0 : i32
    %c0_i32_0 = arith.constant 0 : i32
    %c0_i32_1 = arith.constant 0 : i32
    return %c0_i32, %c0_i32_0 : i32, i32
  }
  func.func @transform_4(%arg0: i32) -> (i32, i32) {
    %c0_i32 = arith.constant 0 : i32
    %c0_i32_0 = arith.constant 0 : i32
    %c0_i32_1 = arith.constant 0 : i32
    return %c0_i32, %c0_i32_0 : i32, i32
  }
  func.func @transform_5(%arg0: i32) -> (i32, i32) {
    %c0_i32 = arith.constant 0 : i32
    %c0_i32_0 = arith.constant 0 : i32
    %c0_i32_1 = arith.constant 0 : i32
    return %c0_i32, %c0_i32_0 : i32, i32
  }
  func.func @transform_6(%arg0: i32) -> (i32, i32) {
    %c0_i32 = arith.constant 0 : i32
    %c0_i32_0 = arith.constant 0 : i32
    %c0_i32_1 = arith.constant 0 : i32
    return %c0_i32, %c0_i32_0 : i32, i32
  }
  func.func @transform_7(%arg0: i32) -> (i32, i32) {
    %c0_i32 = arith.constant 0 : i32
    %c0_i32_0 = arith.constant 0 : i32
    %c0_i32_1 = arith.constant 0 : i32
    return %c0_i32, %c0_i32_0 : i32, i32
  }
}

</mosaic_0001>

<llo_original>
// kernel: neural_net_forward.1
$region0: #{neural_net_forward.1}
  #allocation0 [shape = 'u32[]', space=smem, size = 0x4, offset = 0x4, fixed_abs, tag = 'smem constant byte address 0x4 - core index']
  #allocation1 [shape = 'u32[144,128]{1,0:T(1,128)}', space=vmem, size = 0x12000, scoped, tag = 'internal scratch']
  %s0 = inlined_call_operand.vmem [shape: f32[8,384], index: 0, kind: input, shape index: {}]
  %s1 = inlined_call_operand.hbm [shape: bf16[384,256], index: 1, kind: input, shape index: {}]
  %s2 = inlined_call_operand.vmem [shape: f32[1,256], index: 2, kind: input, shape index: {}]
  %s3 = inlined_call_operand.vmem [shape: f32[1,256], index: 3, kind: input, shape index: {}]
  %s4 = inlined_call_operand.hbm [shape: bf16[256,128], index: 4, kind: input, shape index: {}]
  %s5 = inlined_call_operand.vmem [shape: f32[1,128], index: 5, kind: input, shape index: {}]
  %s6 = inlined_call_operand.vmem [shape: f32[1,128], index: 6, kind: input, shape index: {}]
  %s7 = inlined_call_operand.hbm [shape: f32[8,128], index: 7, kind: output, shape index: {}]
  %s8 = sld [smem:[#allocation0]]
  $region46: #{neural_net_forward.1} parent=0
    _
  %s10 = ssub.s32 1, %s8
  %s11 = scalar_select 0, %s10, %s8
  $region1: #{neural_net_forward.1} parent=0
    #allocation2 [shape = 'u8[196608]{0}', space=vmem, size = 0x30000, scoped, tag = 'input window, operand 1, single buffered']
    #allocation3 [shape = 's32[1]{0}', space=sflag, size = 0x4, scoped, tag = 'scoped memory for neural_net_forward.1']
    #allocation4 [shape = 's32[1]{0}', space=sflag, size = 0x4, scoped, tag = 'scoped memory for neural_net_forward.1']
    #allocation5 [shape = 'u8[65536]{0}', space=vmem, size = 0x10000, scoped, tag = 'input window, operand 4, single buffered']
    #allocation6 [shape = 's32[1]{0}', space=sflag, size = 0x4, scoped, tag = 'scoped memory for neural_net_forward.1']
    #allocation7 [shape = 'u8[4096]{0}', space=vmem, size = 0x1000, scoped, tag = 'output window, operand 0, single buffered']
    %12 = vsyncpa [#allocation3], 0
    %13 = vsyncpa [#allocation6], 0
    %14 = vsyncpa [#allocation4], 0
    // Predicated region
    $region2: #{neural_net_forward.1} parent=1 // pred_check
      _
    $region3: #{neural_net_forward.1} parent=1 // pred_check_branch
      %16 = sbr.rel (0) target = $region5
    $region4: #{neural_net_forward.1} parent=1 // pred_region
      _
    $region5: #{neural_net_forward.1} parent=1 // pred_fallthru
      _
    // Predicated region
    $region6: #{neural_net_forward.1} parent=1 // pred_check
      _
    $region7: #{neural_net_forward.1} parent=1 // pred_check_branch
      %18 = sbr.rel (0) target = $region9
    $region8: #{neural_net_forward.1} parent=1 // pred_region
      %s20 = ssub.s32 6144, 6144
      %21 = vsyncadd [#allocation3], %s20
      %s22 = sshll.u32 [#allocation2], 4
      %s23 = int_to_ptr.vmem [resolvable:$true] %s22
      %28 = dma.hbm_to_vmem [thread:$0]  %s1, 6144, %s23, [#allocation3], 128, 128, 8
    $region9: #{neural_net_forward.1} parent=1 // pred_fallthru
      _
    // Predicated region
    $region10: #{neural_net_forward.1} parent=1 // pred_check
      _
    $region11: #{neural_net_forward.1} parent=1 // pred_check_branch
      %30 = sbr.rel (0) target = $region13
    $region12: #{neural_net_forward.1} parent=1 // pred_region
      _
    $region13: #{neural_net_forward.1} parent=1 // pred_fallthru
      _
    // Predicated region
    $region14: #{neural_net_forward.1} parent=1 // pred_check
      _
    $region15: #{neural_net_forward.1} parent=1 // pred_check_branch
      %32 = sbr.rel (0) target = $region17
    $region16: #{neural_net_forward.1} parent=1 // pred_region
      _
    $region17: #{neural_net_forward.1} parent=1 // pred_fallthru
      _
    // Predicated region
    $region18: #{neural_net_forward.1} parent=1 // pred_check
      _
    $region19: #{neural_net_forward.1} parent=1 // pred_check_branch
      %34 = sbr.rel (0) target = $region21
    $region20: #{neural_net_forward.1} parent=1 // pred_region
      %s36 = ssub.s32 2048, 2048
      %37 = vsyncadd [#allocation6], %s36
      %s38 = sshll.u32 [#allocation5], 4
      %s39 = int_to_ptr.vmem [resolvable:$true] %s38
      %44 = dma.hbm_to_vmem [thread:$0]  %s4, 2048, %s39, [#allocation6], 64, 64, 4
    $region21: #{neural_net_forward.1} parent=1 // pred_fallthru
      _
    // Predicated region
    $region22: #{neural_net_forward.1} parent=1 // pred_check
      _
    $region23: #{neural_net_forward.1} parent=1 // pred_check_branch
      %46 = sbr.rel (0) target = $region25
    $region24: #{neural_net_forward.1} parent=1 // pred_region
      _
    $region25: #{neural_net_forward.1} parent=1 // pred_fallthru
      _
    // Predicated region
    $region26: #{neural_net_forward.1} parent=1 // pred_check
      _
    $region27: #{neural_net_forward.1} parent=1 // pred_check_branch
      %48 = sbr.rel (0) target = $region29
    $region28: #{neural_net_forward.1} parent=1 // pred_region
      _
    $region29: #{neural_net_forward.1} parent=1 // pred_fallthru
      _
    // Predicated region
    $region30: #{neural_net_forward.1} parent=1 // pred_check
      _
    $region31: #{neural_net_forward.1} parent=1 // pred_check_branch
      %50 = sbr.rel (0) target = $region33
    $region32: #{neural_net_forward.1} parent=1 // pred_region
      %51 = dma.done [#allocation3], 6144
    $region33: #{neural_net_forward.1} parent=1 // pred_fallthru
      _
    // Predicated region
    $region34: #{neural_net_forward.1} parent=1 // pred_check
      _
    $region35: #{neural_net_forward.1} parent=1 // pred_check_branch
      %53 = sbr.rel (0) target = $region37
    $region36: #{neural_net_forward.1} parent=1 // pred_region
      %54 = dma.done [#allocation6], 2048
    $region37: #{neural_net_forward.1} parent=1 // pred_fallthru
      _
    %v56 = vld [vmem:[%s0] sm:$0xff]
    %v57 = vld [vmem:[%s0 + $0x8] sm:$0xff]
    %v58 = vld [vmem:[%s0 + $0x10] sm:$0xff]
    %v59 = vpack.c.bf16 %v56, %v56
    %v60 = vpack.c.bf16 %v57, %v57
    %v61 = vpack.c.bf16 %v58, %v58
    %v62 = vld [vmem:[#allocation2] sm:$0xff]
    %v63 = vld [vmem:[#allocation2 + $0x8] sm:$0xff]
    %v64 = vld [vmem:[#allocation2 + $0x10] sm:$0xff]
    %v65 = vld [vmem:[#allocation2 + $0x18] sm:$0xff]
    %v66 = vld [vmem:[#allocation2 + $0x20] sm:$0xff]
    %v67 = vld [vmem:[#allocation2 + $0x28] sm:$0xff]
    %v68 = vld [vmem:[#allocation2 + $0x30] sm:$0xff]
    %v69 = vld [vmem:[#allocation2 + $0x38] sm:$0xff]
    %v70 = vld [vmem:[#allocation2 + $0x40] sm:$0xff]
    %v71 = vld [vmem:[#allocation2 + $0x48] sm:$0xff]
    %v72 = vld [vmem:[#allocation2 + $0x50] sm:$0xff]
    %v73 = vld [vmem:[#allocation2 + $0x58] sm:$0xff]
    %v74 = vld [vmem:[#allocation2 + $0x60] sm:$0xff]
    %v75 = vld [vmem:[#allocation2 + $0x68] sm:$0xff]
    %v76 = vld [vmem:[#allocation2 + $0x70] sm:$0xff]
    %v77 = vld [vmem:[#allocation2 + $0x78] sm:$0xff]
    %v78 = vld [vmem:[#allocation2 + $0x80] sm:$0xff]
    %v79 = vld [vmem:[#allocation2 + $0x88] sm:$0xff]
    %v80 = vld [vmem:[#allocation2 + $0x90] sm:$0xff]
    %v81 = vld [vmem:[#allocation2 + $0x98] sm:$0xff]
    %v82 = vld [vmem:[#allocation2 + $0xa0] sm:$0xff]
    %v83 = vld [vmem:[#allocation2 + $0xa8] sm:$0xff]
    %v84 = vld [vmem:[#allocation2 + $0xb0] sm:$0xff]
    %v85 = vld [vmem:[#allocation2 + $0xb8] sm:$0xff]
    %v86 = vld [vmem:[#allocation2 + $0xc0] sm:$0xff]
    %v87 = vld [vmem:[#allocation2 + $0xc8] sm:$0xff]
    %v88 = vld [vmem:[#allocation2 + $0xd0] sm:$0xff]
    %v89 = vld [vmem:[#allocation2 + $0xd8] sm:$0xff]
    %v90 = vld [vmem:[#allocation2 + $0xe0] sm:$0xff]
    %v91 = vld [vmem:[#allocation2 + $0xe8] sm:$0xff]
    %v92 = vld [vmem:[#allocation2 + $0xf0] sm:$0xff]
    %v93 = vld [vmem:[#allocation2 + $0xf8] sm:$0xff]
    %v94 = vld [vmem:[#allocation2 + $0x100] sm:$0xff]
    %v95 = vld [vmem:[#allocation2 + $0x108] sm:$0xff]
    %v96 = vld [vmem:[#allocation2 + $0x110] sm:$0xff]
    %v97 = vld [vmem:[#allocation2 + $0x118] sm:$0xff]
    %v98 = vld [vmem:[#allocation2 + $0x120] sm:$0xff]
    %v99 = vld [vmem:[#allocation2 + $0x128] sm:$0xff]
    %v100 = vld [vmem:[#allocation2 + $0x130] sm:$0xff]
    %v101 = vld [vmem:[#allocation2 + $0x138] sm:$0xff]
    %v102 = vld [vmem:[#allocation2 + $0x140] sm:$0xff]
    %v103 = vld [vmem:[#allocation2 + $0x148] sm:$0xff]
    %v104 = vld [vmem:[#allocation2 + $0x150] sm:$0xff]
    %v105 = vld [vmem:[#allocation2 + $0x158] sm:$0xff]
    %v106 = vld [vmem:[#allocation2 + $0x160] sm:$0xff]
    %v107 = vld [vmem:[#allocation2 + $0x168] sm:$0xff]
    %v108 = vld [vmem:[#allocation2 + $0x170] sm:$0xff]
    %v109 = vld [vmem:[#allocation2 + $0x178] sm:$0xff]
    %v158 = vunpack.c.l.b16 %v62
    %v159 = vunpack.c.h.b16 %v62
    %v160 = vunpack.c.l.b16 %v63
    %v161 = vunpack.c.h.b16 %v63
    %v162 = vunpack.c.l.b16 %v64
    %v163 = vunpack.c.h.b16 %v64
    %v164 = vunpack.c.l.b16 %v65
    %v165 = vunpack.c.h.b16 %v65
    %v166 = vunpack.c.l.b16 %v66
    %v167 = vunpack.c.h.b16 %v66
    %v168 = vunpack.c.l.b16 %v67
    %v169 = vunpack.c.h.b16 %v67
    %v170 = vunpack.c.l.b16 %v68
    %v171 = vunpack.c.h.b16 %v68
    %v172 = vunpack.c.l.b16 %v69
    %v173 = vunpack.c.h.b16 %v69
    %v174 = vunpack.c.l.b16 %v70
    %v175 = vunpack.c.h.b16 %v70
    %v176 = vunpack.c.l.b16 %v71
    %v177 = vunpack.c.h.b16 %v71
    %v178 = vunpack.c.l.b16 %v72
    %v179 = vunpack.c.h.b16 %v72
    %v180 = vunpack.c.l.b16 %v73
    %v181 = vunpack.c.h.b16 %v73
    %v182 = vunpack.c.l.b16 %v74
    %v183 = vunpack.c.h.b16 %v74
    %v184 = vunpack.c.l.b16 %v75
    %v185 = vunpack.c.h.b16 %v75
    %v186 = vunpack.c.l.b16 %v76
    %v187 = vunpack.c.h.b16 %v76
    %v188 = vunpack.c.l.b16 %v77
    %v189 = vunpack.c.h.b16 %v77
    %v190 = vunpack.c.l.b16 %v78
    %v191 = vunpack.c.h.b16 %v78
    %v192 = vunpack.c.l.b16 %v79
    %v193 = vunpack.c.h.b16 %v79
    %v194 = vunpack.c.l.b16 %v80
    %v195 = vunpack.c.h.b16 %v80
    %v196 = vunpack.c.l.b16 %v81
    %v197 = vunpack.c.h.b16 %v81
    %v198 = vunpack.c.l.b16 %v82
    %v199 = vunpack.c.h.b16 %v82
    %v200 = vunpack.c.l.b16 %v83
    %v201 = vunpack.c.h.b16 %v83
    %v202 = vunpack.c.l.b16 %v84
    %v203 = vunpack.c.h.b16 %v84
    %v204 = vunpack.c.l.b16 %v85
    %v205 = vunpack.c.h.b16 %v85
    %v206 = vunpack.c.l.b16 %v86
    %v207 = vunpack.c.h.b16 %v86
    %v208 = vunpack.c.l.b16 %v87
    %v209 = vunpack.c.h.b16 %v87
    %v210 = vunpack.c.l.b16 %v88
    %v211 = vunpack.c.h.b16 %v88
    %v212 = vunpack.c.l.b16 %v89
    %v213 = vunpack.c.h.b16 %v89
    %v214 = vunpack.c.l.b16 %v90
    %v215 = vunpack.c.h.b16 %v90
    %v216 = vunpack.c.l.b16 %v91
    %v217 = vunpack.c.h.b16 %v91
    %v218 = vunpack.c.l.b16 %v92
    %v219 = vunpack.c.h.b16 %v92
    %v220 = vunpack.c.l.b16 %v93
    %v221 = vunpack.c.h.b16 %v93
    %v222 = vunpack.c.l.b16 %v94
    %v223 = vunpack.c.h.b16 %v94
    %v224 = vunpack.c.l.b16 %v95
    %v225 = vunpack.c.h.b16 %v95
    %v226 = vunpack.c.l.b16 %v96
    %v227 = vunpack.c.h.b16 %v96
    %v228 = vunpack.c.l.b16 %v97
    %v229 = vunpack.c.h.b16 %v97
    %v230 = vunpack.c.l.b16 %v98
    %v231 = vunpack.c.h.b16 %v98
    %v232 = vunpack.c.l.b16 %v99
    %v233 = vunpack.c.h.b16 %v99
    %v234 = vunpack.c.l.b16 %v100
    %v235 = vunpack.c.h.b16 %v100
    %v236 = vunpack.c.l.b16 %v101
    %v237 = vunpack.c.h.b16 %v101
    %v238 = vunpack.c.l.b16 %v102
    %v239 = vunpack.c.h.b16 %v102
    %v240 = vunpack.c.l.b16 %v103
    %v241 = vunpack.c.h.b16 %v103
    %v242 = vunpack.c.l.b16 %v104
    %v243 = vunpack.c.h.b16 %v104
    %v244 = vunpack.c.l.b16 %v105
    %v245 = vunpack.c.h.b16 %v105
    %v246 = vunpack.c.l.b16 %v106
    %v247 = vunpack.c.h.b16 %v106
    %v248 = vunpack.c.l.b16 %v107
    %v249 = vunpack.c.h.b16 %v107
    %v250 = vunpack.c.l.b16 %v108
    %v251 = vunpack.c.h.b16 %v108
    %v252 = vunpack.c.l.b16 %v109
    %v253 = vunpack.c.h.b16 %v109
    %v254 = vpack.c.b16 %v160, %v158
    %v255 = vpack.c.b16 %v161, %v159
    %v256 = vpack.c.b16 %v164, %v162
    %v257 = vpack.c.b16 %v165, %v163
    %v258 = vpack.c.b16 %v168, %v166
    %v259 = vpack.c.b16 %v169, %v167
    %v260 = vpack.c.b16 %v172, %v170
    %v261 = vpack.c.b16 %v173, %v171
    %v262 = vpack.c.b16 %v176, %v174
    %v263 = vpack.c.b16 %v177, %v175
    %v264 = vpack.c.b16 %v180, %v178
    %v265 = vpack.c.b16 %v181, %v179
    %v266 = vpack.c.b16 %v184, %v182
    %v267 = vpack.c.b16 %v185, %v183
    %v268 = vpack.c.b16 %v188, %v186
    %v269 = vpack.c.b16 %v189, %v187
    %v270 = vpack.c.b16 %v192, %v190
    %v271 = vpack.c.b16 %v193, %v191
    %v272 = vpack.c.b16 %v196, %v194
    %v273 = vpack.c.b16 %v197, %v195
    %v274 = vpack.c.b16 %v200, %v198
    %v275 = vpack.c.b16 %v201, %v199
    %v276 = vpack.c.b16 %v204, %v202
    %v277 = vpack.c.b16 %v205, %v203
    %v278 = vpack.c.b16 %v208, %v206
    %v279 = vpack.c.b16 %v209, %v207
    %v280 = vpack.c.b16 %v212, %v210
    %v281 = vpack.c.b16 %v213, %v211
    %v282 = vpack.c.b16 %v216, %v214
    %v283 = vpack.c.b16 %v217, %v215
    %v284 = vpack.c.b16 %v220, %v218
    %v285 = vpack.c.b16 %v221, %v219
    %v286 = vpack.c.b16 %v224, %v222
    %v287 = vpack.c.b16 %v225, %v223
    %v288 = vpack.c.b16 %v228, %v226
    %v289 = vpack.c.b16 %v229, %v227
    %v290 = vpack.c.b16 %v232, %v230
    %v291 = vpack.c.b16 %v233, %v231
    %v292 = vpack.c.b16 %v236, %v234
    %v293 = vpack.c.b16 %v237, %v235
    %v294 = vpack.c.b16 %v240, %v238
    %v295 = vpack.c.b16 %v241, %v239
    %v296 = vpack.c.b16 %v244, %v242
    %v297 = vpack.c.b16 %v245, %v243
    %v298 = vpack.c.b16 %v248, %v246
    %v299 = vpack.c.b16 %v249, %v247
    %v300 = vpack.c.b16 %v252, %v250
    %v301 = vpack.c.b16 %v253, %v251
    %350 = vmatprep.subr.bf16.mxu0 %v255
    %351 = vmatpush1.bf16.msra.mxu0 %v254
    %352 = vmatprep.subr.bf16.mxu0 %v257
    %353 = vmatpush1.bf16.msra.mxu0 %v256
    %354 = vmatprep.subr.bf16.mxu0 %v259
    %355 = vmatpush1.bf16.msra.mxu0 %v258
    %356 = vmatprep.subr.bf16.mxu0 %v261
    %357 = vmatpush1.bf16.msra.mxu0 %v260
    %358 = vmatprep.subr.bf16.mxu0 %v263
    %359 = vmatpush1.bf16.msra.mxu0 %v262
    %360 = vmatprep.subr.bf16.mxu0 %v265
    %361 = vmatpush1.bf16.msra.mxu0 %v264
    %362 = vmatprep.subr.bf16.mxu0 %v267
    %363 = vmatpush1.bf16.msra.mxu0 %v266
    %364 = vmatprep.subr.bf16.mxu0 %v269
    %365 = vmatpush1.bf16.msra.mxu0 %v268
    %366 = vmatprep.subr.bf16.mxu0 %v271
    %367 = vmatpush1.bf16.msra.mxu0 %v270
    %368 = vmatprep.subr.bf16.mxu0 %v273
    %369 = vmatpush1.bf16.msra.mxu0 %v272
    %370 = vmatprep.subr.bf16.mxu0 %v275
    %371 = vmatpush1.bf16.msra.mxu0 %v274
    %372 = vmatprep.subr.bf16.mxu0 %v277
    %373 = vmatpush1.bf16.msra.mxu0 %v276
    %374 = vmatprep.subr.bf16.mxu0 %v279
    %375 = vmatpush1.bf16.msra.mxu0 %v278
    %376 = vmatprep.subr.bf16.mxu0 %v281
    %377 = vmatpush1.bf16.msra.mxu0 %v280
    %378 = vmatprep.subr.bf16.mxu0 %v283
    %379 = vmatpush1.bf16.msra.mxu0 %v282
    %380 = vmatprep.subr.bf16.mxu0 %v285
    %381 = vmatpush1.bf16.msra.mxu0 %v284
    %382 = vmatprep.mubr.bf16.mxu0 %v60
    %383 = vmatmul.mubr.bf16.gmra.mrb[0].mxu0 %v59
    %v384 = vpop.f32.mrb[0].mxu0
    %v385 = vadd.f32 0.0, %v384
    %v386 = vpop.f32.mrb[0].mxu0
    %v387 = vadd.f32 0.0, %v386
    %v388 = vpop.f32.mrb[0].mxu0
    %v389 = vpop.f32.mrb[0].mxu0
    %390 = vdwg.mxu0
    %391 = vmatprep.subr.bf16.mxu0 %v287
    %392 = vmatpush1.bf16.msra.mxu0 %v286
    %393 = vmatprep.subr.bf16.mxu0 %v289
    %394 = vmatpush1.bf16.msra.mxu0 %v288
    %395 = vmatprep.subr.bf16.mxu0 %v291
    %396 = vmatpush1.bf16.msra.mxu0 %v290
    %397 = vmatprep.subr.bf16.mxu0 %v293
    %398 = vmatpush1.bf16.msra.mxu0 %v292
    %399 = vmatprep.subr.bf16.mxu0 %v295
    %400 = vmatpush1.bf16.msra.mxu0 %v294
    %401 = vmatprep.subr.bf16.mxu0 %v297
    %402 = vmatpush1.bf16.msra.mxu0 %v296
    %403 = vmatprep.subr.bf16.mxu0 %v299
    %404 = vmatpush1.bf16.msra.mxu0 %v298
    %405 = vmatprep.subr.bf16.mxu0 %v301
    %406 = vmatpush1.bf16.msra.mxu0 %v300
    %407 = vmatprep.subr.bf16.mxu0 0
    %408 = vmatpush1.bf16.msra.mxu0 0
    %409 = vmatprep.subr.bf16.mxu0 0
    %410 = vmatpush1.bf16.msra.mxu0 0
    %411 = vmatprep.subr.bf16.mxu0 0
    %412 = vmatpush1.bf16.msra.mxu0 0
    %413 = vmatprep.subr.bf16.mxu0 0
    %414 = vmatpush1.bf16.msra.mxu0 0
    %415 = vmatprep.subr.bf16.mxu0 0
    %416 = vmatpush1.bf16.msra.mxu0 0
    %417 = vmatprep.subr.bf16.mxu0 0
    %418 = vmatpush1.bf16.msra.mxu0 0
    %419 = vmatprep.subr.bf16.mxu0 0
    %420 = vmatpush1.bf16.msra.mxu0 0
    %421 = vmatprep.subr.bf16.mxu0 0
    %422 = vmatpush1.bf16.msra.mxu0 0
    %423 = vmatprep.mubr.bf16.mxu0 0
    %424 = vmatmul.mubr.bf16.gmra.mrb[0].mxu0 %v61
    %v425 = vpop.f32.mrb[0].mxu0
    %v426 = vadd.f32 %v385, %v425
    %v427 = vpop.f32.mrb[0].mxu0
    %v428 = vadd.f32 %v387, %v427
    %v429 = vpop.f32.mrb[0].mxu0
    %v430 = vpop.f32.mrb[0].mxu0
    %431 = vdwg.mxu0
    %v432 = vld [vmem:[%s2] sm:$0x3]
    %v433 = vld [vmem:[%s3] sm:$0x3]
    %v434 = vrot.slane %v426, 4
    %v435 = vadd.f32 %v426, %v434
    %v436 = vrot.slane %v435, 2
    %v437 = vadd.f32 %v435, %v436
    %v438 = vrot.slane %v437, 1
    %v439 = vadd.f32 %v437, %v438
    %v440 = vrot.slane %v428, 4
    %v441 = vadd.f32 %v428, %v440
    %v442 = vrot.slane %v441, 2
    %v443 = vadd.f32 %v441, %v442
    %v444 = vrot.slane %v443, 1
    %v445 = vadd.f32 %v443, %v444
    %v446 = vmul.f32 %v426, %v426
    %v447 = vmul.f32 %v428, %v428
    %v448 = vrot.slane %v446, 4
    %v449 = vadd.f32 %v446, %v448
    %v450 = vrot.slane %v449, 2
    %v451 = vadd.f32 %v449, %v450
    %v452 = vrot.slane %v451, 1
    %v453 = vadd.f32 %v451, %v452
    %v454 = vrot.slane %v447, 4
    %v455 = vadd.f32 %v447, %v454
    %v456 = vrot.slane %v455, 2
    %v457 = vadd.f32 %v455, %v456
    %v458 = vrot.slane %v457, 1
    %v459 = vadd.f32 %v457, %v458
    %v460 = vmul.f32 %v439, 0.125
    %v461 = vmul.f32 %v445, 0.125
    %v462 = vmul.f32 %v453, 0.125
    %v463 = vmul.f32 %v459, 0.125
    %v464 = vmul.f32 %v460, %v460
    %v465 = vmul.f32 %v461, %v461
    %v466 = vsub.f32 %v462, %v464
    %v467 = vsub.f32 %v463, %v465
    %v468 = vadd.f32 %v466, 1e-05
    %v469 = vadd.f32 %v467, 1e-05
    %v470 = vrsqrt.pop %v468
    %v471 = vrsqrt.pop %v469
    %v474 = vcombine.low %v470, %v471
    %v476 = vunpack.c.l.s4 1966171168
    %v477 = vunpack.c.0.s8 %v476
    %v478 = vlaneseq
    %v479 = vshrl.u32 %v478, 7
    %v480 = vsub.s32 %v477, %v479
    %v481 = vrot.slane %v474, %v480
    %v483 = vunpack.c.l.s4 1966171168
    %v484 = vunpack.c.0.s8 %v483
    %v485 = vlaneseq
    %v486 = vshrl.u32 %v485, 7
    %v487 = vsub.s32 %v484, %v486
    %v488 = vrot.slane %v481, %v487
    %v490 = vmul.f32 %v432, %v488
    %v492 = vlaneseq
    %v493 = vshrl.u32 %v492, 7
    %v494 = vsub.s32 0, %v493
    %v495 = vrot.slane %v490, %v494
    %v496 = vlaneseq
    %v497 = vshrl.u32 %v496, 7
    %v498 = vsub.s32 1, %v497
    %v499 = vrot.slane %v490, %v498
    %v502 = vmul.f32 %v460, %v495
    %v503 = vmul.f32 %v461, %v499
    %v506 = vcombine.low %v502, %v503
    %v508 = vunpack.c.l.s4 1966171168
    %v509 = vunpack.c.0.s8 %v508
    %v510 = vlaneseq
    %v511 = vshrl.u32 %v510, 7
    %v512 = vsub.s32 %v509, %v511
    %v513 = vrot.slane %v506, %v512
    %v515 = vunpack.c.l.s4 1966171168
    %v516 = vunpack.c.0.s8 %v515
    %v517 = vlaneseq
    %v518 = vshrl.u32 %v517, 7
    %v519 = vsub.s32 %v516, %v518
    %v520 = vrot.slane %v513, %v519
    %v522 = vsub.f32 %v433, %v520
    %v523 = vmul.f32 %v426, %v495
    %v524 = vmul.f32 %v428, %v499
    %v526 = vlaneseq
    %v527 = vshrl.u32 %v526, 7
    %v528 = vsub.s32 0, %v527
    %v529 = vrot.slane %v522, %v528
    %v530 = vlaneseq
    %v531 = vshrl.u32 %v530, 7
    %v532 = vsub.s32 1, %v531
    %v533 = vrot.slane %v522, %v532
    %v536 = vadd.f32 %v523, %v529
    %v537 = vadd.f32 %v524, %v533
    %vm538 = vcmp.gt.f32.partialorder %v536, 0.0
    %vm539 = vcmp.gt.f32.partialorder %v537, 0.0
    %v540 = vmul.f32 %v536, 0.01
    %v541 = vmul.f32 %v537, 0.01
    %v542 = vsel %vm538, %v536, %v540
    %v543 = vsel %vm539, %v537, %v541
    %v544 = vpack.c.bf16 %v542, %v542
    %v545 = vpack.c.bf16 %v543, %v543
    %v546 = vld [vmem:[#allocation5] sm:$0xf]
    %v547 = vld [vmem:[#allocation5 + $0x4] sm:$0xf]
    %v548 = vld [vmem:[#allocation5 + $0x8] sm:$0xf]
    %v549 = vld [vmem:[#allocation5 + $0xc] sm:$0xf]
    %v550 = vld [vmem:[#allocation5 + $0x10] sm:$0xf]
    %v551 = vld [vmem:[#allocation5 + $0x14] sm:$0xf]
    %v552 = vld [vmem:[#allocation5 + $0x18] sm:$0xf]
    %v553 = vld [vmem:[#allocation5 + $0x1c] sm:$0xf]
    %v554 = vld [vmem:[#allocation5 + $0x20] sm:$0xf]
    %v555 = vld [vmem:[#allocation5 + $0x24] sm:$0xf]
    %v556 = vld [vmem:[#allocation5 + $0x28] sm:$0xf]
    %v557 = vld [vmem:[#allocation5 + $0x2c] sm:$0xf]
    %v558 = vld [vmem:[#allocation5 + $0x30] sm:$0xf]
    %v559 = vld [vmem:[#allocation5 + $0x34] sm:$0xf]
    %v560 = vld [vmem:[#allocation5 + $0x38] sm:$0xf]
    %v561 = vld [vmem:[#allocation5 + $0x3c] sm:$0xf]
    %v562 = vld [vmem:[#allocation5 + $0x40] sm:$0xf]
    %v563 = vld [vmem:[#allocation5 + $0x44] sm:$0xf]
    %v564 = vld [vmem:[#allocation5 + $0x48] sm:$0xf]
    %v565 = vld [vmem:[#allocation5 + $0x4c] sm:$0xf]
    %v566 = vld [vmem:[#allocation5 + $0x50] sm:$0xf]
    %v567 = vld [vmem:[#allocation5 + $0x54] sm:$0xf]
    %v568 = vld [vmem:[#allocation5 + $0x58] sm:$0xf]
    %v569 = vld [vmem:[#allocation5 + $0x5c] sm:$0xf]
    %v570 = vld [vmem:[#allocation5 + $0x60] sm:$0xf]
    %v571 = vld [vmem:[#allocation5 + $0x64] sm:$0xf]
    %v572 = vld [vmem:[#allocation5 + $0x68] sm:$0xf]
    %v573 = vld [vmem:[#allocation5 + $0x6c] sm:$0xf]
    %v574 = vld [vmem:[#allocation5 + $0x70] sm:$0xf]
    %v575 = vld [vmem:[#allocation5 + $0x74] sm:$0xf]
    %v576 = vld [vmem:[#allocation5 + $0x78] sm:$0xf]
    %v577 = vld [vmem:[#allocation5 + $0x7c] sm:$0xf]
    %v610 = vunpack.c.l.b16 %v546
    %v611 = vunpack.c.l.b16 %v547
    %v612 = vunpack.c.l.b16 %v548
    %v613 = vunpack.c.l.b16 %v549
    %v614 = vunpack.c.l.b16 %v550
    %v615 = vunpack.c.l.b16 %v551
    %v616 = vunpack.c.l.b16 %v552
    %v617 = vunpack.c.l.b16 %v553
    %v618 = vunpack.c.l.b16 %v554
    %v619 = vunpack.c.l.b16 %v555
    %v620 = vunpack.c.l.b16 %v556
    %v621 = vunpack.c.l.b16 %v557
    %v622 = vunpack.c.l.b16 %v558
    %v623 = vunpack.c.l.b16 %v559
    %v624 = vunpack.c.l.b16 %v560
    %v625 = vunpack.c.l.b16 %v561
    %v626 = vunpack.c.l.b16 %v562
    %v627 = vunpack.c.l.b16 %v563
    %v628 = vunpack.c.l.b16 %v564
    %v629 = vunpack.c.l.b16 %v565
    %v630 = vunpack.c.l.b16 %v566
    %v631 = vunpack.c.l.b16 %v567
    %v632 = vunpack.c.l.b16 %v568
    %v633 = vunpack.c.l.b16 %v569
    %v634 = vunpack.c.l.b16 %v570
    %v635 = vunpack.c.l.b16 %v571
    %v636 = vunpack.c.l.b16 %v572
    %v637 = vunpack.c.l.b16 %v573
    %v638 = vunpack.c.l.b16 %v574
    %v639 = vunpack.c.l.b16 %v575
    %v640 = vunpack.c.l.b16 %v576
    %v641 = vunpack.c.l.b16 %v577
    %v642 = vpack.c.b16 %v611, %v610
    %v643 = vpack.c.b16 %v613, %v612
    %v644 = vpack.c.b16 %v615, %v614
    %v645 = vpack.c.b16 %v617, %v616
    %v646 = vpack.c.b16 %v619, %v618
    %v647 = vpack.c.b16 %v621, %v620
    %v648 = vpack.c.b16 %v623, %v622
    %v649 = vpack.c.b16 %v625, %v624
    %v650 = vpack.c.b16 %v627, %v626
    %v651 = vpack.c.b16 %v629, %v628
    %v652 = vpack.c.b16 %v631, %v630
    %v653 = vpack.c.b16 %v633, %v632
    %v654 = vpack.c.b16 %v635, %v634
    %v655 = vpack.c.b16 %v637, %v636
    %v656 = vpack.c.b16 %v639, %v638
    %v657 = vpack.c.b16 %v641, %v640
    %674 = vmatprep.subr.bf16.mxu0 0
    %675 = vmatpush1.bf16.msra.mxu0 %v642
    %676 = vmatprep.subr.bf16.mxu0 0
    %677 = vmatpush1.bf16.msra.mxu0 %v643
    %678 = vmatprep.subr.bf16.mxu0 0
    %679 = vmatpush1.bf16.msra.mxu0 %v644
    %680 = vmatprep.subr.bf16.mxu0 0
    %681 = vmatpush1.bf16.msra.mxu0 %v645
    %682 = vmatprep.subr.bf16.mxu0 0
    %683 = vmatpush1.bf16.msra.mxu0 %v646
    %684 = vmatprep.subr.bf16.mxu0 0
    %685 = vmatpush1.bf16.msra.mxu0 %v647
    %686 = vmatprep.subr.bf16.mxu0 0
    %687 = vmatpush1.bf16.msra.mxu0 %v648
    %688 = vmatprep.subr.bf16.mxu0 0
    %689 = vmatpush1.bf16.msra.mxu0 %v649
    %690 = vmatprep.subr.bf16.mxu0 0
    %691 = vmatpush1.bf16.msra.mxu0 %v650
    %692 = vmatprep.subr.bf16.mxu0 0
    %693 = vmatpush1.bf16.msra.mxu0 %v651
    %694 = vmatprep.subr.bf16.mxu0 0
    %695 = vmatpush1.bf16.msra.mxu0 %v652
    %696 = vmatprep.subr.bf16.mxu0 0
    %697 = vmatpush1.bf16.msra.mxu0 %v653
    %698 = vmatprep.subr.bf16.mxu0 0
    %699 = vmatpush1.bf16.msra.mxu0 %v654
    %700 = vmatprep.subr.bf16.mxu0 0
    %701 = vmatpush1.bf16.msra.mxu0 %v655
    %702 = vmatprep.subr.bf16.mxu0 0
    %703 = vmatpush1.bf16.msra.mxu0 %v656
    %704 = vmatprep.subr.bf16.mxu0 0
    %705 = vmatpush1.bf16.msra.mxu0 %v657
    %706 = vmatprep.mubr.bf16.mxu0 %v545
    %707 = vmatmul.mubr.bf16.gmra.mrb[0].mxu0 %v544
    %v708 = vpop.f32.mrb[0].mxu0
    %v709 = vadd.f32 0.0, %v708
    %v710 = vpop.f32.mrb[0].mxu0
    %v711 = vpop.f32.mrb[0].mxu0
    %v712 = vpop.f32.mrb[0].mxu0
    %713 = vdwg.mxu0
    %v714 = vld [vmem:[%s5] sm:$0x1]
    %v715 = vld [vmem:[%s6] sm:$0x1]
    %v716 = vrot.slane %v709, 4
    %v717 = vadd.f32 %v709, %v716
    %v718 = vrot.slane %v717, 2
    %v719 = vadd.f32 %v717, %v718
    %v720 = vrot.slane %v719, 1
    %v721 = vadd.f32 %v719, %v720
    %v722 = vmul.f32 %v709, %v709
    %v723 = vrot.slane %v722, 4
    %v724 = vadd.f32 %v722, %v723
    %v725 = vrot.slane %v724, 2
    %v726 = vadd.f32 %v724, %v725
    %v727 = vrot.slane %v726, 1
    %v728 = vadd.f32 %v726, %v727
    %v729 = vmul.f32 %v721, 0.125
    %v730 = vmul.f32 %v728, 0.125
    %v731 = vmul.f32 %v729, %v729
    %v732 = vsub.f32 %v730, %v731
    %v733 = vadd.f32 %v732, 1e-05
    %v734 = vrsqrt.pop %v733
    %v735 = vmul.f32 %v714, %v734
    %v736 = vmul.f32 %v729, %v735
    %v737 = vsub.f32 %v715, %v736
    %v739 = vlaneseq
    %v740 = vshrl.u32 %v739, 7
    %v741 = vsub.s32 0, %v740
    %v742 = vrot.slane %v735, %v741
    %v744 = vmul.f32 %v709, %v742
    %v746 = vlaneseq
    %v747 = vshrl.u32 %v746, 7
    %v748 = vsub.s32 0, %v747
    %v749 = vrot.slane %v737, %v748
    %v751 = vadd.f32 %v744, %v749
    %vm752 = vcmp.gt.f32.partialorder %v751, 0.0
    %v753 = vmul.f32 %v751, 0.01
    %v754 = vsel %vm752, %v751, %v753
    %755 = vst [vmem:[#allocation7] sm:$0xff] %v754
    // Predicated region
    $region38: #{neural_net_forward.1} parent=1 // pred_check
      _
    $region39: #{neural_net_forward.1} parent=1 // pred_check_branch
      %757 = sbr.rel (0) target = $region41
    $region40: #{neural_net_forward.1} parent=1 // pred_region
      %s759 = ssub.s32 128, 128
      %760 = vsyncadd [#allocation4], %s759
      %s762 = sshll.u32 [#allocation7], 4
      %s763 = int_to_ptr.vmem [resolvable:$true] %s762
      %765 = dma.vmem_to_hbm [thread:$0]  %s763, 128, %s7, [#allocation4]
    $region41: #{neural_net_forward.1} parent=1 // pred_fallthru
      _
    // Predicated region
    $region42: #{neural_net_forward.1} parent=1 // pred_check
      _
    $region43: #{neural_net_forward.1} parent=1 // pred_check_branch
      %767 = sbr.rel (0) target = $region45
    $region44: #{neural_net_forward.1} parent=1 // pred_region
      %768 = dma.done [#allocation4], 128
    $region45: #{neural_net_forward.1} parent=1 // pred_fallthru
      _
    %769 = vsyncpa [#allocation3], 1
    %770 = vsyncpa [#allocation6], 1
    %771 = vsyncpa [#allocation4], 1

</llo_original>
